<compile_context>
chip_gen: v7x
topology: tpu7x:2x2x1
jax: 0.10.0
libtpu: 0.0.40
codegen_flags: <defaults>
</compile_context>

<pallas_src>
import numpy as np
import jax
import jax.numpy as jnp
from jax.experimental import pallas as pl
from jax.experimental.pallas import tpu as pltpu

NUM_CLASSES = 1          # cfg.MODEL.ROI_HEADS.NUM_CLASSES (salient)
IOU_THRESHOLD = 0.5      # cfg.MODEL.ROI_HEADS.IOU_THRESHOLDS = [0.5]
OUT_ROWS = 8             # packed int32 output: one full sublane tile


def _roi_match_kernel(gtcls_ref, gt_ref, pr_ref, out_ref):
    # gtcls_ref: SMEM (B_pad, G) int32  (scalar prefetch — whole array)
    # gt_ref:    VMEM (Bt, G, 4)  f32   (natural x1,y1,x2,y2 layout)
    # pr_ref:    VMEM (Bt, 4, Pp) f32   (coords on sublanes, P on lanes)
    # out_ref:   VMEM (Bt, 8, Pp) i32   row0=matched_idxs, row1=matched_labels,
    #                                   row2=gt_classes per proposal, rows 3..7 = 0
    Bt, G, _ = gt_ref.shape
    Pp = pr_ref.shape[2]
    step = pl.program_id(0)

    # zero the whole block once -> rows 3..7 deterministic, single dense store
    out_ref[...] = jnp.zeros((Bt, OUT_ROWS, Pp), jnp.int32)

    for b in range(Bt):                                   # static unroll
        pr = pr_ref[b]                                    # (4, Pp)
        px1 = pr[0:1, :]
        py1 = pr[1:2, :]
        px2 = pr[2:3, :]
        py2 = pr[3:4, :]
        area_p = (px2 - px1) * (py2 - py1)                # (1, Pp)

        gt = gt_ref[b]                                    # (G, 4)
        gx1 = gt[:, 0:1]                                  # (G, 1)
        gy1 = gt[:, 1:2]
        gx2 = gt[:, 2:3]
        gy2 = gt[:, 3:4]
        area_g = (gx2 - gx1) * (gy2 - gy1)                # (G, 1)

        # ---- pairwise_iou (detectron2 semantics), stays in vregs -------------
        iw = jnp.maximum(jnp.minimum(gx2, px2) - jnp.maximum(gx1, px1), 0.0)
        ih = jnp.maximum(jnp.minimum(gy2, py2) - jnp.maximum(gy1, py1), 0.0)
        inter = iw * ih                                   # (G, Pp)
        union = area_g + area_p - inter                   # (G, Pp)
        # divide -> exact EUP reciprocal + VPU multiply; where-guard kept so the
        # inter==0,union==0 case yields 0 (untaken NaN branch is non-trapping).
        iou = jnp.where(inter > 0.0, inter * pl.reciprocal(union), 0.0)

        # ---- Matcher + class gather as an unrolled G loop (pure VPU selects) --
        # strict '>' keeps the first index on ties == jnp/np.argmax semantics.
        img = step * Bt + b
        best_val = iou[0:1, :]                            # (1, Pp)
        best_idx = jnp.zeros((1, Pp), jnp.int32)
        best_cls = jnp.full((1, Pp), gtcls_ref[img, 0], jnp.int32)
        for g in range(1, G):
            v = iou[g:g + 1, :]
            better = v > best_val
            best_val = jnp.where(better, v, best_val)
            best_idx = jnp.where(better, jnp.int32(g), best_idx)
            best_cls = jnp.where(better, gtcls_ref[img, g], best_cls)

        lbl = (best_val >= IOU_THRESHOLD).astype(jnp.int32)   # IOU_LABELS=[0,1]
        # has_gt path of _sample_proposals: background -> num_classes
        # (the matched_labels == -1 branch is dead code for IOU_LABELS=[0,1])
        cls_out = jnp.where(lbl == 0, jnp.int32(NUM_CLASSES), best_cls)

        # ---- direct lane-dense row stores into the packed tile ---------------
        out_ref[b, 0:1, :] = best_idx
        out_ref[b, 1:2, :] = lbl
        out_ref[b, 2:3, :] = cls_out


def roi_heads_label_proposals(gt_boxes, prop_boxes, gt_classes):
    """gt_boxes: [B, G, 4] f32, prop_boxes: [B, P, 4] f32, gt_classes: [B, G] i32.

    Returns (matched_idxs, matched_labels, gt_classes_per_proposal), each [B, P] i32.
    The IoU matrix is an internal intermediate (never written to HBM).
    """
    B, G, _ = gt_boxes.shape
    P = prop_boxes.shape[1]

    # Lane-pad P to a multiple of 128 -> unmasked vst for every (..., P) tile.
    Pp = ((P + 127) // 128) * 128
    lane_tiles = Pp // 128

    # Bt images per grid step: keep per-step vector intermediates within the
    # 64-vreg file (roughly <= 8 live (8,128) f32 tiles per image per lane tile)
    # and keep >= 2 grid steps whenever B >= 2 (both v7x TensorCores busy).
    Bt = max(1, min(pl.cdiv(B, 2), 8 // lane_tiles))
    n_steps = pl.cdiv(B, Bt)
    Bp = n_steps * Bt

    gt_boxes = gt_boxes.astype(jnp.float32)
    prop_boxes = prop_boxes.astype(jnp.float32)
    gt_classes = gt_classes.astype(jnp.int32)

    if Bp != B:
        pad_b = Bp - B
        gt_boxes = jnp.pad(gt_boxes, ((0, pad_b), (0, 0), (0, 0)))
        prop_boxes = jnp.pad(prop_boxes, ((0, pad_b), (0, 0), (0, 0)))
        gt_classes = jnp.pad(gt_classes, ((0, pad_b), (0, 0)))
    if Pp != P:
        # zero-area proposal padding -> iou = 0 / label = 0; sliced off below.
        prop_boxes = jnp.pad(prop_boxes, ((0, 0), (0, Pp - P), (0, 0)))

    # Proposals: [B, P, 4] -> [B, 4, P] so P sits on lanes.  gt boxes stay in
    # their natural [B, G, 4] layout (full-extent block, no transpose needed).
    pr_t = jnp.transpose(prop_boxes, (0, 2, 1))

    grid_spec = pltpu.PrefetchScalarGridSpec(
        num_scalar_prefetch=1,                       # gt_classes -> SMEM
        grid=(n_steps,),
        in_specs=[
            pl.BlockSpec((Bt, G, 4), lambda s, cls: (s, 0, 0)),
            pl.BlockSpec((Bt, 4, Pp), lambda s, cls: (s, 0, 0)),
        ],
        out_specs=pl.BlockSpec((Bt, OUT_ROWS, Pp), lambda s, cls: (s, 0, 0)),
    )

    packed = pl.pallas_call(
        _roi_match_kernel,
        out_shape=jax.ShapeDtypeStruct((Bp, OUT_ROWS, Pp), jnp.int32),
        grid_spec=grid_spec,
        compiler_params=pltpu.CompilerParams(
            dimension_semantics=("parallel",)),
    )(gt_classes, gt_boxes, pr_t)

    matched_idxs = packed[:B, 0, :P]
    matched_labels = packed[:B, 1, :P]
    gt_cls_per_prop = packed[:B, 2, :P]
    return matched_idxs, matched_labels, gt_cls_per_prop


def _reference(gt_boxes, prop_boxes, gt_classes):
    """Pure-numpy reference of the same math (detectron2 semantics)."""
    gt = np.asarray(gt_boxes, np.float32)
    pr = np.asarray(prop_boxes, np.float32)
    gc = np.asarray(gt_classes, np.int32)
    B, G, _ = gt.shape
    P = pr.shape[1]
    idxs = np.zeros((B, P), np.int32)
    lbls = np.zeros((B, P), np.int32)
    clss = np.zeros((B, P), np.int32)
    for b in range(B):
        gx1, gy1, gx2, gy2 = [gt[b, :, i][:, None] for i in range(4)]
        px1, py1, px2, py2 = [pr[b, :, i][None, :] for i in range(4)]
        iw = np.maximum(np.minimum(gx2, px2) - np.maximum(gx1, px1), 0.0)
        ih = np.maximum(np.minimum(gy2, py2) - np.maximum(gy1, py1), 0.0)
        inter = iw * ih
        ag = (gx2 - gx1) * (gy2 - gy1)
        ap = (px2 - px1) * (py2 - py1)
        iou = np.where(inter > 0, inter / (ag + ap - inter), 0.0)
        mi = np.argmax(iou, axis=0).astype(np.int32)
        mv = iou.max(axis=0)
        ml = np.where(mv >= IOU_THRESHOLD, 1, 0).astype(np.int32)
        cc = gc[b][mi]
        cc = np.where(ml == 0, NUM_CLASSES, cc)
        idxs[b], lbls[b], clss[b] = mi, ml, cc
    return idxs, lbls, clss


if __name__ == "__main__":
    key = jax.random.PRNGKey(0)
    B, G, P = 2, 8, 128

    k1, k2, k3, k4, k5 = jax.random.split(key, 5)

    def make_boxes(kx, ky, n):
        xy = jax.random.uniform(kx, (B, n, 2), minval=0.0, maxval=64.0)
        wh = jax.random.uniform(ky, (B, n, 2), minval=1.0, maxval=32.0)
        return jnp.concatenate([xy, xy + wh], axis=-1)  # [B, n, 4] (x1,y1,x2,y2)

    gt_boxes = make_boxes(k1, k2, G)
    # proposals: jittered copies of gt + random boxes so both IoU regimes appear
    prop_boxes = make_boxes(k3, k4, P)
    jitter = 2.0 * jax.random.normal(k5, (B, G, 4))
    prop_boxes = prop_boxes.at[:, :G, :].set(gt_boxes + jitter)
    gt_classes = jnp.zeros((B, G), jnp.int32)  # all gt are class 0 (salient)

    midx, mlbl, mcls = roi_heads_label_proposals(gt_boxes, prop_boxes, gt_classes)
    jax.block_until_ready((midx, mlbl, mcls))

    # correctness check vs. pure-numpy reference
    r_idx, r_lbl, r_cls = _reference(gt_boxes, prop_boxes, gt_classes)
    assert np.array_equal(np.asarray(midx), r_idx), "matched_idxs mismatch"
    assert np.array_equal(np.asarray(mlbl), r_lbl), "matched_labels mismatch"
    assert np.array_equal(np.asarray(mcls), r_cls), "gt_classes mismatch"

    # TODO(synk): subsample_labels (random fg/bg subsampling), add_ground_truth_to_proposals,
    # NMS-based test-time inference and event-storage logging are host-side / data-dependent
    # control flow with no clean Pallas equivalent; forward() itself raises NotImplementedError.

    print("KERNEL_OK")
</pallas_src>

<mosaic_0001>
module attributes {stable_mosaic.version = 11 : i64} {
  func.func @_roi_match_kernel(%arg0: i32, %arg1: memref<2x8xi32, #tpu.memory_space<smem>>, %arg2: memref<1x8x4xf32, #tpu.memory_space<vmem>>, %arg3: memref<1x4x128xf32, #tpu.memory_space<vmem>>, %arg4: memref<1x8x128xi32, #tpu.memory_space<vmem>>) attributes {dimension_semantics = [#tpu.dimension_semantics<parallel>], iteration_bounds = array<i64: 2>, scalar_prefetch = 1 : i64, scratch_operands = 0 : i64, tpu.core_type = #tpu.core_type<tc>, window_params = [{transform_indices = @transform_0, window_bounds = array<i64: 1, 8, 4>}, {transform_indices = @transform_1, window_bounds = array<i64: 1, 4, 128>}, {transform_indices = @transform_2, window_bounds = array<i64: 1, 8, 128>}]} {
    %c0_i32 = arith.constant 0 : i32
    %0 = vector.broadcast %c0_i32 : i32 to vector<1x8x128xi32>
    %c0 = arith.constant 0 : index
    %c0_0 = arith.constant 0 : index
    %c0_1 = arith.constant 0 : index
    %1 = vector.load %arg4[%c0, %c0_0, %c0_1] : memref<1x8x128xi32, #tpu.memory_space<vmem>>, vector<1x8x128xi32>
    tpu.vector_store %arg4[%c0, %c0_0, %c0_1], %0 {strides = array<i32>} : memref<1x8x128xi32, #tpu.memory_space<vmem>>, vector<1x8x128xi32>,
    %c0_2 = arith.constant 0 : index
    %c0_3 = arith.constant 0 : index
    %c0_4 = arith.constant 0 : index
    %2 = vector.load %arg3[%c0_2, %c0_3, %c0_4] : memref<1x4x128xf32, #tpu.memory_space<vmem>>, vector<1x4x128xf32>
    %3 = vector.shape_cast %2 : vector<1x4x128xf32> to vector<4x128xf32>
    %4 = vector.extract_strided_slice %3 {offsets = [0, 0], sizes = [1, 128], strides = [1, 1]} : vector<4x128xf32> to vector<1x128xf32>
    %5 = vector.extract_strided_slice %3 {offsets = [1, 0], sizes = [1, 128], strides = [1, 1]} : vector<4x128xf32> to vector<1x128xf32>
    %6 = vector.extract_strided_slice %3 {offsets = [2, 0], sizes = [1, 128], strides = [1, 1]} : vector<4x128xf32> to vector<1x128xf32>
    %7 = vector.extract_strided_slice %3 {offsets = [3, 0], sizes = [1, 128], strides = [1, 1]} : vector<4x128xf32> to vector<1x128xf32>
    %8 = arith.subf %6, %4 : vector<1x128xf32>
    %9 = arith.subf %7, %5 : vector<1x128xf32>
    %10 = arith.mulf %8, %9 : vector<1x128xf32>
    %c0_5 = arith.constant 0 : index
    %c0_6 = arith.constant 0 : index
    %c0_7 = arith.constant 0 : index
    %11 = vector.load %arg2[%c0_5, %c0_6, %c0_7] : memref<1x8x4xf32, #tpu.memory_space<vmem>>, vector<1x8x4xf32>
    %12 = vector.shape_cast %11 : vector<1x8x4xf32> to vector<8x4xf32>
    %13 = vector.extract_strided_slice %12 {offsets = [0, 0], sizes = [8, 1], strides = [1, 1]} : vector<8x4xf32> to vector<8x1xf32>
    %14 = vector.extract_strided_slice %12 {offsets = [0, 1], sizes = [8, 1], strides = [1, 1]} : vector<8x4xf32> to vector<8x1xf32>
    %15 = vector.extract_strided_slice %12 {offsets = [0, 2], sizes = [8, 1], strides = [1, 1]} : vector<8x4xf32> to vector<8x1xf32>
    %16 = vector.extract_strided_slice %12 {offsets = [0, 3], sizes = [8, 1], strides = [1, 1]} : vector<8x4xf32> to vector<8x1xf32>
    %17 = arith.subf %15, %13 : vector<8x1xf32>
    %18 = arith.subf %16, %14 : vector<8x1xf32>
    %19 = arith.mulf %17, %18 : vector<8x1xf32>
    %20 = vector.broadcast %15 : vector<8x1xf32> to vector<8x128xf32>
    %21 = vector.broadcast %6 : vector<1x128xf32> to vector<8x128xf32>
    %22 = arith.minimumf %20, %21 : vector<8x128xf32>
    %23 = vector.broadcast %13 : vector<8x1xf32> to vector<8x128xf32>
    %24 = vector.broadcast %4 : vector<1x128xf32> to vector<8x128xf32>
    %25 = arith.maximumf %23, %24 : vector<8x128xf32>
    %26 = arith.subf %22, %25 : vector<8x128xf32>
    %cst = arith.constant 0.000000e+00 : f32
    %27 = vector.broadcast %cst : f32 to vector<8x128xf32>
    %28 = arith.maximumf %26, %27 : vector<8x128xf32>
    %29 = vector.broadcast %16 : vector<8x1xf32> to vector<8x128xf32>
    %30 = vector.broadcast %7 : vector<1x128xf32> to vector<8x128xf32>
    %31 = arith.minimumf %29, %30 : vector<8x128xf32>
    %32 = vector.broadcast %14 : vector<8x1xf32> to vector<8x128xf32>
    %33 = vector.broadcast %5 : vector<1x128xf32> to vector<8x128xf32>
    %34 = arith.maximumf %32, %33 : vector<8x128xf32>
    %35 = arith.subf %31, %34 : vector<8x128xf32>
    %cst_8 = arith.constant 0.000000e+00 : f32
    %36 = vector.broadcast %cst_8 : f32 to vector<8x128xf32>
    %37 = arith.maximumf %35, %36 : vector<8x128xf32>
    %38 = arith.mulf %28, %37 : vector<8x128xf32>
    %39 = vector.broadcast %19 : vector<8x1xf32> to vector<8x128xf32>
    %40 = vector.broadcast %10 : vector<1x128xf32> to vector<8x128xf32>
    %41 = arith.addf %39, %40 : vector<8x128xf32>
    %42 = arith.subf %41, %38 : vector<8x128xf32>
    %cst_9 = arith.constant 0.000000e+00 : f32
    %43 = vector.broadcast %cst_9 : f32 to vector<8x128xf32>
    %44 = arith.cmpf ogt, %38, %43 : vector<8x128xf32>
    %45 = tpu.reciprocal %42 : vector<8x128xf32> -> vector<8x128xf32>
    %46 = arith.mulf %38, %45 : vector<8x128xf32>
    %cst_10 = arith.constant 0.000000e+00 : f32
    %47 = vector.broadcast %cst_10 : f32 to vector<8x128xf32>
    %48 = arith.select %44, %46, %47 : vector<8x128xi1>, vector<8x128xf32>
    %c1_i32 = arith.constant 1 : i32
    %49 = arith.muli %arg0, %c1_i32 : i32
    %c0_i32_11 = arith.constant 0 : i32
    %50 = arith.addi %49, %c0_i32_11 : i32
    %51 = vector.extract_strided_slice %48 {offsets = [0, 0], sizes = [1, 128], strides = [1, 1]} : vector<8x128xf32> to vector<1x128xf32>
    %c0_i32_12 = arith.constant 0 : i32
    %52 = vector.broadcast %c0_i32_12 : i32 to vector<1x128xi32>
    %53 = arith.index_cast %50 : i32 to index
    %c0_13 = arith.constant 0 : index
    %54 = memref.load %arg1[%53, %c0_13] : memref<2x8xi32, #tpu.memory_space<smem>>
    %55 = vector.broadcast %54 : i32 to vector<1x128xi32>
    %56 = vector.extract_strided_slice %48 {offsets = [1, 0], sizes = [1, 128], strides = [1, 1]} : vector<8x128xf32> to vector<1x128xf32>
    %57 = arith.cmpf ogt, %56, %51 : vector<1x128xf32>
    %58 = arith.select %57, %56, %51 : vector<1x128xi1>, vector<1x128xf32>
    %c1_i32_14 = arith.constant 1 : i32
    %59 = vector.broadcast %c1_i32_14 : i32 to vector<1x128xi32>
    %60 = arith.select %57, %59, %52 : vector<1x128xi1>, vector<1x128xi32>
    %61 = arith.index_cast %50 : i32 to index
    %c1 = arith.constant 1 : index
    %62 = memref.load %arg1[%61, %c1] : memref<2x8xi32, #tpu.memory_space<smem>>
    %63 = vector.broadcast %62 : i32 to vector<1x128xi32>
    %64 = arith.select %57, %63, %55 : vector<1x128xi1>, vector<1x128xi32>
    %65 = vector.extract_strided_slice %48 {offsets = [2, 0], sizes = [1, 128], strides = [1, 1]} : vector<8x128xf32> to vector<1x128xf32>
    %66 = arith.cmpf ogt, %65, %58 : vector<1x128xf32>
    %67 = arith.select %66, %65, %58 : vector<1x128xi1>, vector<1x128xf32>
    %c2_i32 = arith.constant 2 : i32
    %68 = vector.broadcast %c2_i32 : i32 to vector<1x128xi32>
    %69 = arith.select %66, %68, %60 : vector<1x128xi1>, vector<1x128xi32>
    %70 = arith.index_cast %50 : i32 to index
    %c2 = arith.constant 2 : index
    %71 = memref.load %arg1[%70, %c2] : memref<2x8xi32, #tpu.memory_space<smem>>
    %72 = vector.broadcast %71 : i32 to vector<1x128xi32>
    %73 = arith.select %66, %72, %64 : vector<1x128xi1>, vector<1x128xi32>
    %74 = vector.extract_strided_slice %48 {offsets = [3, 0], sizes = [1, 128], strides = [1, 1]} : vector<8x128xf32> to vector<1x128xf32>
    %75 = arith.cmpf ogt, %74, %67 : vector<1x128xf32>
    %76 = arith.select %75, %74, %67 : vector<1x128xi1>, vector<1x128xf32>
    %c3_i32 = arith.constant 3 : i32
    %77 = vector.broadcast %c3_i32 : i32 to vector<1x128xi32>
    %78 = arith.select %75, %77, %69 : vector<1x128xi1>, vector<1x128xi32>
    %79 = arith.index_cast %50 : i32 to index
    %c3 = arith.constant 3 : index
    %80 = memref.load %arg1[%79, %c3] : memref<2x8xi32, #tpu.memory_space<smem>>
    %81 = vector.broadcast %80 : i32 to vector<1x128xi32>
    %82 = arith.select %75, %81, %73 : vector<1x128xi1>, vector<1x128xi32>
    %83 = vector.extract_strided_slice %48 {offsets = [4, 0], sizes = [1, 128], strides = [1, 1]} : vector<8x128xf32> to vector<1x128xf32>
    %84 = arith.cmpf ogt, %83, %76 : vector<1x128xf32>
    %85 = arith.select %84, %83, %76 : vector<1x128xi1>, vector<1x128xf32>
    %c4_i32 = arith.constant 4 : i32
    %86 = vector.broadcast %c4_i32 : i32 to vector<1x128xi32>
    %87 = arith.select %84, %86, %78 : vector<1x128xi1>, vector<1x128xi32>
    %88 = arith.index_cast %50 : i32 to index
    %c4 = arith.constant 4 : index
    %89 = memref.load %arg1[%88, %c4] : memref<2x8xi32, #tpu.memory_space<smem>>
    %90 = vector.broadcast %89 : i32 to vector<1x128xi32>
    %91 = arith.select %84, %90, %82 : vector<1x128xi1>, vector<1x128xi32>
    %92 = vector.extract_strided_slice %48 {offsets = [5, 0], sizes = [1, 128], strides = [1, 1]} : vector<8x128xf32> to vector<1x128xf32>
    %93 = arith.cmpf ogt, %92, %85 : vector<1x128xf32>
    %94 = arith.select %93, %92, %85 : vector<1x128xi1>, vector<1x128xf32>
    %c5_i32 = arith.constant 5 : i32
    %95 = vector.broadcast %c5_i32 : i32 to vector<1x128xi32>
    %96 = arith.select %93, %95, %87 : vector<1x128xi1>, vector<1x128xi32>
    %97 = arith.index_cast %50 : i32 to index
    %c5 = arith.constant 5 : index
    %98 = memref.load %arg1[%97, %c5] : memref<2x8xi32, #tpu.memory_space<smem>>
    %99 = vector.broadcast %98 : i32 to vector<1x128xi32>
    %100 = arith.select %93, %99, %91 : vector<1x128xi1>, vector<1x128xi32>
    %101 = vector.extract_strided_slice %48 {offsets = [6, 0], sizes = [1, 128], strides = [1, 1]} : vector<8x128xf32> to vector<1x128xf32>
    %102 = arith.cmpf ogt, %101, %94 : vector<1x128xf32>
    %103 = arith.select %102, %101, %94 : vector<1x128xi1>, vector<1x128xf32>
    %c6_i32 = arith.constant 6 : i32
    %104 = vector.broadcast %c6_i32 : i32 to vector<1x128xi32>
    %105 = arith.select %102, %104, %96 : vector<1x128xi1>, vector<1x128xi32>
    %106 = arith.index_cast %50 : i32 to index
    %c6 = arith.constant 6 : index
    %107 = memref.load %arg1[%106, %c6] : memref<2x8xi32, #tpu.memory_space<smem>>
    %108 = vector.broadcast %107 : i32 to vector<1x128xi32>
    %109 = arith.select %102, %108, %100 : vector<1x128xi1>, vector<1x128xi32>
    %110 = vector.extract_strided_slice %48 {offsets = [7, 0], sizes = [1, 128], strides = [1, 1]} : vector<8x128xf32> to vector<1x128xf32>
    %111 = arith.cmpf ogt, %110, %103 : vector<1x128xf32>
    %112 = arith.select %111, %110, %103 : vector<1x128xi1>, vector<1x128xf32>
    %c7_i32 = arith.constant 7 : i32
    %113 = vector.broadcast %c7_i32 : i32 to vector<1x128xi32>
    %114 = arith.select %111, %113, %105 : vector<1x128xi1>, vector<1x128xi32>
    %115 = arith.index_cast %50 : i32 to index
    %c7 = arith.constant 7 : index
    %116 = memref.load %arg1[%115, %c7] : memref<2x8xi32, #tpu.memory_space<smem>>
    %117 = vector.broadcast %116 : i32 to vector<1x128xi32>
    %118 = arith.select %111, %117, %109 : vector<1x128xi1>, vector<1x128xi32>
    %cst_15 = arith.constant 5.000000e-01 : f32
    %119 = vector.broadcast %cst_15 : f32 to vector<1x128xf32>
    %120 = arith.cmpf oge, %112, %119 : vector<1x128xf32>
    %121 = arith.extui %120 : vector<1x128xi1> to vector<1x128xi32>
    %c0_i32_16 = arith.constant 0 : i32
    %122 = vector.broadcast %c0_i32_16 : i32 to vector<1x128xi32>
    %123 = arith.cmpi eq, %121, %122 : vector<1x128xi32>
    %c1_i32_17 = arith.constant 1 : i32
    %124 = vector.broadcast %c1_i32_17 : i32 to vector<1x128xi32>
    %125 = arith.select %123, %124, %118 : vector<1x128xi1>, vector<1x128xi32>
    %c0_18 = arith.constant 0 : index
    %c0_19 = arith.constant 0 : index
    %c0_20 = arith.constant 0 : index
    %126 = vector.load %arg4[%c0_18, %c0_19, %c0_20] : memref<1x8x128xi32, #tpu.memory_space<vmem>>, vector<1x1x128xi32>
    %127 = vector.shape_cast %126 : vector<1x1x128xi32> to vector<1x128xi32>
    %128 = vector.shape_cast %114 : vector<1x128xi32> to vector<1x1x128xi32>
    tpu.vector_store %arg4[%c0_18, %c0_19, %c0_20], %128 {strides = array<i32>} : memref<1x8x128xi32, #tpu.memory_space<vmem>>, vector<1x1x128xi32>,
    %c0_21 = arith.constant 0 : index
    %c1_22 = arith.constant 1 : index
    %c0_23 = arith.constant 0 : index
    %129 = vector.load %arg4[%c0_21, %c1_22, %c0_23] : memref<1x8x128xi32, #tpu.memory_space<vmem>>, vector<1x1x128xi32>
    %130 = vector.shape_cast %129 : vector<1x1x128xi32> to vector<1x128xi32>
    %131 = vector.shape_cast %121 : vector<1x128xi32> to vector<1x1x128xi32>
    tpu.vector_store %arg4[%c0_21, %c1_22, %c0_23], %131 {strides = array<i32>} : memref<1x8x128xi32, #tpu.memory_space<vmem>>, vector<1x1x128xi32>,
    %c0_24 = arith.constant 0 : index
    %c2_25 = arith.constant 2 : index
    %c0_26 = arith.constant 0 : index
    %132 = vector.load %arg4[%c0_24, %c2_25, %c0_26] : memref<1x8x128xi32, #tpu.memory_space<vmem>>, vector<1x1x128xi32>
    %133 = vector.shape_cast %132 : vector<1x1x128xi32> to vector<1x128xi32>
    %134 = vector.shape_cast %125 : vector<1x128xi32> to vector<1x1x128xi32>
    tpu.vector_store %arg4[%c0_24, %c2_25, %c0_26], %134 {strides = array<i32>} : memref<1x8x128xi32, #tpu.memory_space<vmem>>, vector<1x1x128xi32>,
    return
  }
  func.func @transform_0(%arg0: i32, %arg1: memref<2x8xi32, #tpu.memory_space<smem>>) -> (i32, i32, i32) {
    %c0_i32 = arith.constant 0 : i32
    %c0_i32_0 = arith.constant 0 : i32
    %c0_i32_1 = arith.constant 0 : i32
    return %arg0, %c0_i32, %c0_i32_0 : i32, i32, i32
  }
  func.func @transform_1(%arg0: i32, %arg1: memref<2x8xi32, #tpu.memory_space<smem>>) -> (i32, i32, i32) {
    %c0_i32 = arith.constant 0 : i32
    %c0_i32_0 = arith.constant 0 : i32
    %c0_i32_1 = arith.constant 0 : i32
    return %arg0, %c0_i32, %c0_i32_0 : i32, i32, i32
  }
  func.func @transform_2(%arg0: i32, %arg1: memref<2x8xi32, #tpu.memory_space<smem>>) -> (i32, i32, i32) {
    %c0_i32 = arith.constant 0 : i32
    %c0_i32_0 = arith.constant 0 : i32
    %c0_i32_1 = arith.constant 0 : i32
    return %arg0, %c0_i32, %c0_i32_0 : i32, i32, i32
  }
}

</mosaic_0001>

<llo_original>
// kernel: tpu_custom_call.1
$region0: #{tpu_custom_call.1}
  #allocation0 [shape = 'u32[]', space=smem, size = 0x4, offset = 0x4, fixed_abs, tag = 'smem constant byte address 0x4 - core index']
  #allocation1 [shape = 'u32[144,128]{1,0:T(1,128)}', space=vmem, size = 0x12000, scoped, tag = 'internal scratch']
  #allocation2 [shape = 's32[1]{0}', space=sflag, size = 0x4, scoped, tag = 'scoped memory for tpu_custom_call.1']
  #allocation3 [shape = 'u8[1024]{0}', space=smem, size = 0x400, scoped, tag = 'prefetched SMEM operand 0']
  %s0 = inlined_call_operand.vmem [shape: s32[2,8], index: 0, kind: input, shape index: {}]
  %s1 = inlined_call_operand.vmem [shape: f32[2,8,4], index: 1, kind: input, shape index: {}]
  %s2 = inlined_call_operand.vmem [shape: f32[2,4,128], index: 2, kind: input, shape index: {}]
  %s3 = inlined_call_operand.hbm [shape: s32[2,8,128], index: 3, kind: output, shape index: {}]
  %s4 = sld [smem:[#allocation0]]
  $region41: #{tpu_custom_call.1} parent=0
    _
  %s6 = ssub.s32 1, %s4
  %s7 = scalar_select 0, %s6, %s4
  %s8 = sshll.u32 %s0, 4
  %s9 = int_to_ptr.vmem [resolvable:$true] %s8
  %11 = dma.vmem_to_smem %s9, 32, [#allocation3], [#allocation2]
  %12 = dma.done [#allocation2], 32
  %13 = sfence
  $region1: #{tpu_custom_call.1} parent=0
    #allocation4 [shape = 'u8[8192]{0}', space=vmem, size = 0x2000, scoped, tag = 'output window, operand 0']
    #allocation5 [shape = 's32[2]{0}', space=sflag, size = 0x8, scoped, tag = 'scoped memory for tpu_custom_call.1']
    %14 = vsyncpa [#allocation5], 0
    %s15 = scalar_lea.sflag [#allocation5], 1
    %16 = vsyncpa %s15, 0
    loop: start=0, step=1, limit=4
    $region2: #{tpu_custom_call.1} parent=1 // loop_pre_header
      _
    $region3: #{tpu_custom_call.1} parent=1 // loop_header
      %s18 = sphi 0, %s22
      %p19 = scmp.ge.s32.totalorder %s18, 4
      %s28 = sphi 0, %s30
      %s31 = sphi 0, %s28
      %s32 = sphi 0, %s31
      %s48 = sphi 0, %s32
      %s54 = sphi 0, %s56
      %s57 = sphi 0, %s54
      %s58 = sphi 0, %s57
      %s74 = sphi 0, %s58
      %s80 = sphi 0, %s82
      %s83 = sphi 0, %s80
      %s84 = sphi 0, %s83
      %s100 = sphi 0, %s84
    $region4: #{tpu_custom_call.1} parent=1 // loop_header_branch
      %21 = sbr.rel (%p19) target = $region8
    $region5: #{tpu_custom_call.1} parent=1 // loop_body
      %s23 = ssub.s32 %s18, 1
      %s24 = ssub.s32 %s18, 2
      %s25 = sadd.s32 %s18, 1
      %s26 = ssub.s32 %s18, %s25
      %p27 = scmp.eq.s32.totalorder %s26, 0
      %s29 = sadd.s32 %s28, 1
      %s30 = scalar_select %p27, %s28, %s29
      %p33 = pneg %p27
      %p34 = scmp.eq.s32.totalorder %s18, 1
      %p35 = por %p33, %p34
      %p36 = scmp.ne.s32.totalorder %s28, %s31
      %p37 = scmp.eq.s32.totalorder %s18, 0
      %p38 = por %p36, %p37
      %p39 = scmp.ne.s32.totalorder %s28, %s31
      %p40 = scmp.eq.s32.totalorder %s23, 1
      %p41 = por %p39, %p40
      %p42 = scmp.ne.s32.totalorder %s31, %s32
      %p43 = scmp.eq.s32.totalorder %s23, 0
      %p44 = por %p42, %p43
      %p45 = scmp.ne.s32.totalorder %s31, %s32
      %p46 = scmp.eq.s32.totalorder %s24, 1
      %p47 = por %p45, %p46
      %p49 = scmp.ne.s32.totalorder %s32, %s48
      %p50 = scmp.eq.s32.totalorder %s24, 0
      %p51 = por %p49, %p50
      %s52 = ssub.s32 %s18, %s25
      %p53 = scmp.eq.s32.totalorder %s52, 0
      %s55 = sadd.s32 %s54, 1
      %s56 = scalar_select %p53, %s54, %s55
      %p59 = pneg %p53
      %p60 = scmp.eq.s32.totalorder %s18, 1
      %p61 = por %p59, %p60
      %p62 = scmp.ne.s32.totalorder %s54, %s57
      %p63 = scmp.eq.s32.totalorder %s18, 0
      %p64 = por %p62, %p63
      %p65 = scmp.ne.s32.totalorder %s54, %s57
      %p66 = scmp.eq.s32.totalorder %s23, 1
      %p67 = por %p65, %p66
      %p68 = scmp.ne.s32.totalorder %s57, %s58
      %p69 = scmp.eq.s32.totalorder %s23, 0
      %p70 = por %p68, %p69
      %p71 = scmp.ne.s32.totalorder %s57, %s58
      %p72 = scmp.eq.s32.totalorder %s24, 1
      %p73 = por %p71, %p72
      %p75 = scmp.ne.s32.totalorder %s58, %s74
      %p76 = scmp.eq.s32.totalorder %s24, 0
      %p77 = por %p75, %p76
      %s78 = ssub.s32 %s18, %s25
      %p79 = scmp.eq.s32.totalorder %s78, 0
      %s81 = sadd.s32 %s80, 1
      %s82 = scalar_select %p79, %s80, %s81
      %p85 = pneg %p79
      %p86 = scmp.eq.s32.totalorder %s18, 1
      %p87 = por %p85, %p86
      %p88 = scmp.ne.s32.totalorder %s80, %s83
      %p89 = scmp.eq.s32.totalorder %s18, 0
      %p90 = por %p88, %p89
      %p91 = scmp.ne.s32.totalorder %s80, %s83
      %p92 = scmp.eq.s32.totalorder %s23, 1
      %p93 = por %p91, %p92
      %p94 = scmp.ne.s32.totalorder %s83, %s84
      %p95 = scmp.eq.s32.totalorder %s23, 0
      %p96 = por %p94, %p95
      %p97 = scmp.ne.s32.totalorder %s83, %s84
      %p98 = scmp.eq.s32.totalorder %s24, 1
      %p99 = por %p97, %p98
      %p101 = scmp.ne.s32.totalorder %s84, %s100
      %p102 = scmp.eq.s32.totalorder %s24, 0
      %p103 = por %p101, %p102
      %p104 = scmp.le.s32.totalorder 1, %s18
      %p105 = scmp.lt.s32.totalorder %s18, 3
      %p106 = pnand %p104, %p105
      %p107 = pneg %p106
      // Predicated region
      $region9: #{tpu_custom_call.1} parent=5 // pred_check
        _
      $region10: #{tpu_custom_call.1} parent=5 // pred_check_branch
        %109 = sbr.rel (%p106) target = $region12
      $region11: #{tpu_custom_call.1} parent=5 // pred_region
        %s110 = ssub.s32 %s18, 1
      $region12: #{tpu_custom_call.1} parent=5 // pred_fallthru
        _
      %p111 = scmp.lt.s32.totalorder %s18, 2
      // Predicated region
      $region13: #{tpu_custom_call.1} parent=5 // pred_check
        %p112 = pneg %p111
      $region14: #{tpu_custom_call.1} parent=5 // pred_check_branch
        %114 = sbr.rel (%p112) target = $region16
      $region15: #{tpu_custom_call.1} parent=5 // pred_region
        // Predicated region
        $region17: #{tpu_custom_call.1} parent=15 // pred_check
          %p115 = pneg %p38
        $region18: #{tpu_custom_call.1} parent=15 // pred_check_branch
          %117 = sbr.rel (%p115) target = $region20
        $region19: #{tpu_custom_call.1} parent=15 // pred_region
          %p118 = scmp.lt.s32.totalorder %s18, 1
          %s119 = scalar_select %p118, %s18, 1
          %s120 = smul.addr %s119, 8
          %s121 = scalar_lea.vmem %s1, %s120
        $region20: #{tpu_custom_call.1} parent=15 // pred_fallthru
          _
        // Predicated region
        $region21: #{tpu_custom_call.1} parent=15 // pred_check
          %p122 = pneg %p64
        $region22: #{tpu_custom_call.1} parent=15 // pred_check_branch
          %124 = sbr.rel (%p122) target = $region24
        $region23: #{tpu_custom_call.1} parent=15 // pred_region
          %p125 = scmp.lt.s32.totalorder %s18, 1
          %s126 = scalar_select %p125, %s18, 1
          %s127 = smul.addr %s126, 4
          %s128 = scalar_lea.vmem %s2, %s127
        $region24: #{tpu_custom_call.1} parent=15 // pred_fallthru
          _
      $region16: #{tpu_custom_call.1} parent=5 // pred_fallthru
        _
      %p129 = scmp.le.s32.totalorder 1, %s18
      %p130 = scmp.lt.s32.totalorder %s18, 3
      %p131 = pnand %p129, %p130
      %p132 = pneg %p131
      // Predicated region
      $region25: #{tpu_custom_call.1} parent=5 // pred_check
        _
      $region26: #{tpu_custom_call.1} parent=5 // pred_check_branch
        %134 = sbr.rel (%p131) target = $region28
      $region27: #{tpu_custom_call.1} parent=5 // pred_region
        %s135 = ssub.s32 %s18, 1
        %p136 = scmp.lt.s32.totalorder %s23, 1
        %s137 = scalar_select %p136, %s23, 1
        %s138 = smul.addr %s137, 8
        %s139 = scalar_lea.vmem %s1, %s138
        %p140 = pneg %p44
        %p141 = pneg %p41
        %p142 = scmp.lt.s32.totalorder %s23, 1
        %s143 = scalar_select %p142, %s23, 1
        %s144 = smul.addr %s143, 4
        %s145 = scalar_lea.vmem %s2, %s144
        %p146 = pneg %p70
        %p147 = pneg %p67
        %p148 = pneg %p96
        %p149 = pneg %p93
        %s150 = sand.u32 %s83, 1
        %s151 = scalar_lea.sflag [#allocation5], %s150
        %s152 = sand.u32 %s83, 1
        %s153 = smul.addr %s152, 8
        %s154 = scalar_lea.vmem [#allocation4], %s153
        %p155 = scmp.lt.s32.totalorder %s23, 1
        %s156 = scalar_select %p155, %s23, 1
        %s157 = smul.addr %s156, 8
        %s158 = scalar_lea.vmem %s1, %s157
        %p159 = scmp.lt.s32.totalorder %s23, 1
        %s160 = scalar_select %p159, %s23, 1
        %s161 = smul.addr %s160, 4
        %s162 = scalar_lea.vmem %s2, %s161
        %163 = vst [vmem:[%s154] sm:$0xff] 0
        %v164 = vld [vmem:[%s162] sm:$0xf]
        %v166 = vrot.slane %v164, 6
        %v168 = vsub.f32 %v164, %v166
        %v170 = vrot.slane %v168, 1
        %v172 = vmul.f32 %v168, %v170
        %v173 = vld [vmem:[%s158] sm:$0xff]
        %175 = vrot.lane.b32.xlu0 %v173, 2
        %v176 = vpop.permute.xlu0 %175
        %v178 = vsub.f32 %v173, %v176
        %180 = vrot.lane.b32.xlu0 %v178, 127
        %v181 = vpop.permute.xlu0 %180
        %v183 = vmul.f32 %v178, %v181
        %184 = vset.pattern.permute.xlu0 2
        %185 = vperm.xlu0 %184, %v173
        %v186 = vpop.permute.xlu0 %185
        %v188 = vlaneseq
        %v189 = vshrl.u32 %v188, 7
        %v190 = vsub.s32 2, %v189
        %v191 = vrot.slane %v164, %v190
        %v192 = vmin.f32 %v186, %v191
        %193 = vset.pattern.permute.xlu0 0
        %194 = vperm.xlu0 %193, %v173
        %v195 = vpop.permute.xlu0 %194
        %v197 = vlaneseq
        %v198 = vshrl.u32 %v197, 7
        %v199 = vsub.s32 0, %v198
        %v200 = vrot.slane %v164, %v199
        %v201 = vmax.f32 %v195, %v200
        %v202 = vsub.f32 %v192, %v201
        %v203 = vmax.f32 %v202, 0.0
        %204 = vset.pattern.permute.xlu0 3
        %205 = vperm.xlu0 %204, %v173
        %v206 = vpop.permute.xlu0 %205
        %v208 = vlaneseq
        %v209 = vshrl.u32 %v208, 7
        %v210 = vsub.s32 3, %v209
        %v211 = vrot.slane %v164, %v210
        %v212 = vmin.f32 %v206, %v211
        %213 = vset.pattern.permute.xlu0 1
        %214 = vperm.xlu0 %213, %v173
        %v215 = vpop.permute.xlu0 %214
        %v217 = vlaneseq
        %v218 = vshrl.u32 %v217, 7
        %v219 = vsub.s32 1, %v218
        %v220 = vrot.slane %v164, %v219
        %v221 = vmax.f32 %v215, %v220
        %v222 = vsub.f32 %v212, %v221
        %v223 = vmax.f32 %v222, 0.0
        %v224 = vmul.f32 %v203, %v223
        %226 = vset.pattern.permute.xlu0 2
        %227 = vperm.xlu0 %226, %v183
        %v228 = vpop.permute.xlu0 %227
        %v230 = vlaneseq
        %v231 = vshrl.u32 %v230, 7
        %v232 = vsub.s32 2, %v231
        %v233 = vrot.slane %v172, %v232
        %v234 = vadd.f32 %v228, %v233
        %v235 = vsub.f32 %v234, %v224
        %vm236 = vcmp.gt.f32.partialorder %v224, 0.0
        %v237 = vrcp.pop %v235
        %v238 = vmul.f32 %v224, %v237
        %v239 = vsel %vm236, %v238, 0.0
        %s240 = smul.u32 %s23, 128
        %s241 = sld [smem:[#allocation3 + %s240]]
        %v242 = vstv %s241
        %v244 = vrot.slane %v239, 7
        %vm246 = vcmp.gt.f32.partialorder %v239, %v244
        %v247 = vsel %vm246, %v239, %v244
        %v248 = vsel %vm246, 1, 0
        %s249 = sadd.s32 %s240, 1
        %s250 = sld [smem:[#allocation3 + %s249]]
        %v251 = vstv %s250
        %v252 = vsel %vm246, %v251, %v242
        %v254 = vrot.slane %v247, 7
        %vm256 = vcmp.gt.f32.partialorder %v239, %v254
        %v257 = vsel %vm256, %v239, %v254
        %v258 = vrot.slane %v248, 7
        %v259 = vsel %vm256, 2, %v258
        %s260 = sadd.s32 %s240, 2
        %s261 = sld [smem:[#allocation3 + %s260]]
        %v262 = vstv %s261
        %v263 = vrot.slane %v252, 7
        %v264 = vsel %vm256, %v262, %v263
        %v266 = vrot.slane %v257, 7
        %vm268 = vcmp.gt.f32.partialorder %v239, %v266
        %v269 = vsel %vm268, %v239, %v266
        %v270 = vrot.slane %v259, 7
        %v271 = vsel %vm268, 3, %v270
        %s272 = sadd.s32 %s240, 3
        %s273 = sld [smem:[#allocation3 + %s272]]
        %v274 = vstv %s273
        %v275 = vrot.slane %v264, 7
        %v276 = vsel %vm268, %v274, %v275
        %v278 = vrot.slane %v269, 7
        %vm280 = vcmp.gt.f32.partialorder %v239, %v278
        %v281 = vsel %vm280, %v239, %v278
        %v282 = vrot.slane %v271, 7
        %v283 = vsel %vm280, 4, %v282
        %s284 = sadd.s32 %s240, 4
        %s285 = sld [smem:[#allocation3 + %s284]]
        %v286 = vstv %s285
        %v287 = vrot.slane %v276, 7
        %v288 = vsel %vm280, %v286, %v287
        %v290 = vrot.slane %v281, 7
        %vm292 = vcmp.gt.f32.partialorder %v239, %v290
        %v293 = vsel %vm292, %v239, %v290
        %v294 = vrot.slane %v283, 7
        %v295 = vsel %vm292, 5, %v294
        %s296 = sadd.s32 %s240, 5
        %s297 = sld [smem:[#allocation3 + %s296]]
        %v298 = vstv %s297
        %v299 = vrot.slane %v288, 7
        %v300 = vsel %vm292, %v298, %v299
        %v302 = vrot.slane %v293, 7
        %vm304 = vcmp.gt.f32.partialorder %v239, %v302
        %v305 = vsel %vm304, %v239, %v302
        %v306 = vrot.slane %v295, 7
        %v307 = vsel %vm304, 6, %v306
        %s308 = sadd.s32 %s240, 6
        %s309 = sld [smem:[#allocation3 + %s308]]
        %v310 = vstv %s309
        %v311 = vrot.slane %v300, 7
        %v312 = vsel %vm304, %v310, %v311
        %v314 = vrot.slane %v305, 7
        %vm316 = vcmp.gt.f32.partialorder %v239, %v314
        %v317 = vsel %vm316, %v239, %v314
        %v318 = vrot.slane %v307, 7
        %v319 = vsel %vm316, 7, %v318
        %s320 = sadd.s32 %s240, 7
        %s321 = sld [smem:[#allocation3 + %s320]]
        %v322 = vstv %s321
        %v323 = vrot.slane %v312, 7
        %v324 = vsel %vm316, %v322, %v323
        %vm325 = vcmp.ge.f32.partialorder %v317, 0.5
        %v326 = vsel %vm325, 1, 0
        %vm327 = vcmp.eq.s32.totalorder %v326, 0
        %v328 = vsel %vm327, 1, %v324
        %329 = vst [vmem:[%s154 - $0x7] sm:$0x80] %v319
        %330 = vst [vmem:[%s154 - $0x6] sm:$0x80] %v326
        %331 = vst [vmem:[%s154 - $0x5] sm:$0x80] %v328
        %s332 = sand.u32 %s83, 1
        %s333 = scalar_lea.sflag [#allocation5], %s332
        %s334 = sand.u32 %s83, 1
        %s335 = smul.addr %s334, 8
        %s336 = scalar_lea.vmem [#allocation4], %s335
        // Predicated region
        $region29: #{tpu_custom_call.1} parent=27 // pred_check
          %p337 = pneg %p93
        $region30: #{tpu_custom_call.1} parent=27 // pred_check_branch
          %339 = sbr.rel (%p337) target = $region32
        $region31: #{tpu_custom_call.1} parent=27 // pred_region
          %s341 = ssub.s32 128, 128
          %342 = vsyncadd %s333, %s341
          %s343 = smul.addr %s23, 128
          %s344 = scalar_lea.hbm %s3, %s343
          %s346 = sshll.u32 %s336, 4
          %s347 = int_to_ptr.vmem [resolvable:$true] %s346
          %349 = dma.vmem_to_hbm [thread:$0]  %s347, 128, %s344, %s333
        $region32: #{tpu_custom_call.1} parent=27 // pred_fallthru
          _
      $region28: #{tpu_custom_call.1} parent=5 // pred_fallthru
        _
      %p350 = scmp.le.s32.totalorder 2, %s18
      // Predicated region
      $region33: #{tpu_custom_call.1} parent=5 // pred_check
        %p351 = pneg %p350
      $region34: #{tpu_custom_call.1} parent=5 // pred_check_branch
        %353 = sbr.rel (%p351) target = $region36
      $region35: #{tpu_custom_call.1} parent=5 // pred_region
        %s354 = ssub.s32 %s18, 2
        // Predicated region
        $region37: #{tpu_custom_call.1} parent=35 // pred_check
          %p355 = pneg %p99
        $region38: #{tpu_custom_call.1} parent=35 // pred_check_branch
          %357 = sbr.rel (%p355) target = $region40
        $region39: #{tpu_custom_call.1} parent=35 // pred_region
          %s358 = sand.u32 %s84, 1
          %s359 = scalar_lea.sflag [#allocation5], %s358
          %s360 = sand.u32 %s84, 1
          %s361 = smul.addr %s360, 8
          %s362 = scalar_lea.vmem [#allocation4], %s361
          %363 = dma.done %s359, 128
        $region40: #{tpu_custom_call.1} parent=35 // pred_fallthru
          _
      $region36: #{tpu_custom_call.1} parent=5 // pred_fallthru
        _
    $region6: #{tpu_custom_call.1} parent=1 // loop_footer
      %s22 = sadd.s32 1, %s18
    $region7: #{tpu_custom_call.1} parent=1 // loop_footer_branch
      %17 = sbr.rel target = $region3
    $region8: #{tpu_custom_call.1} parent=1 // loop_exit
      _
    %364 = vsyncpa [#allocation5], 1
    %s365 = scalar_lea.sflag [#allocation5], 1
    %366 = vsyncpa %s365, 1

</llo_original>
